<compile_context>
chip_gen: v7x
topology: tpu7x:2x2x1
jax: 0.10.0
libtpu: 0.0.40
codegen_flags: <defaults>
</compile_context>

<pallas_src>
import jax
import jax.numpy as jnp
from jax.experimental import pallas as pl
from jax.experimental.pallas import tpu as pltpu


def _round_up(n, m):
    return ((n + m - 1) // m) * m


def pack_params(params, dtype=jnp.float32):
    """Pack w1,b1,w2,b2,w3,b3 into one (rows, width) slab with 8-row aligned sections.

    Sections are stored already transposed for batch-in-lanes compute:
      w1t (H, ID), w2t (H, H), w3t (OD, H), b1 (H, 1), b2 (H, 1), b3 (OD, 1).
    """
    w1, b1 = params["w1"], params["b1"]          # (ID, H), (1, H)
    w2, b2 = params["w2"], params["b2"]          # (H, H),  (1, H)
    w3, b3 = params["w3"], params["b3"]          # (H, OD), (1, OD)
    ID, H = w1.shape
    OD = w3.shape[1]
    W = max(ID, H, 1)

    sections = [
        ("w1t", w1.T), ("w2t", w2.T), ("w3t", w3.T),
        ("b1", b1.T), ("b2", b2.T), ("b3", b3.T),
    ]
    offs, blocks, row = {}, [], 0
    for name, a in sections:
        r, c = a.shape
        r_pad = _round_up(max(r, 1), 8)          # sublane-aligned section start
        offs[name] = row
        blocks.append(jnp.pad(a, ((0, r_pad - r), (0, W - c))))
        row += r_pad
    packed = jnp.concatenate(blocks, axis=0).astype(dtype)
    return packed, offs, (ID, H, OD)


def _default_tile_b():
    # ~32K rows (~0.4 MB of x per step) saturates HBM on v5e/v6e; newer chips
    # (v7x: ~3.2 TB/s HBM, 64 MiB VMEM per TensorCore) want ~64K rows per step.
    try:
        info = pltpu.get_tpu_info()
        if getattr(info, "vmem_capacity_bytes", 128 << 20) <= (64 << 20):
            return 65536
    except Exception:
        pass
    return 32768


def _choose_tile_b(batch, requested):
    b128 = max(128, _round_up(batch, 128))
    t = max(128, min(_round_up(requested, 128), b128))
    # Keep >= 2 grid steps when the batch is big enough that halving the tile
    # still amortizes the per-step pipeline overhead (megacore sharding on v7x).
    if t >= b128 and b128 >= 2 * 8192:
        t = _round_up(-(-b128 // 2), 128)
    return t


def risk_score_forward(x, params, *, tile_b=None, return_transposed=False):
    """x: (B, input_dim) f32; params: dict of (in,out) weights and (1,out) biases."""
    x = x.astype(jnp.float32)
    B, ID_x = x.shape
    packed, offs, (ID, H, OD) = pack_params(params)
    assert ID == ID_x, (ID, ID_x)

    if tile_b is None:
        tile_b = _default_tile_b()
    tile_b = _choose_tile_b(B, tile_b)
    B_pad = _round_up(B, tile_b)
    num_tiles = B_pad // tile_b

    # Lane-dense input: a (tile_b, 3) block would pad its minor dim to 128 lanes in
    # VMEM (~97% padding); (ID, tile_b) is small, contiguous, and makes large tiles
    # fit VMEM on all generations. XLA fuses the transpose + pad into one copy.
    xt = jnp.pad(x.T, ((0, 0), (0, B_pad - B)))

    o_w1, o_w2, o_w3 = offs["w1t"], offs["w2t"], offs["w3t"]
    o_b1, o_b2, o_b3 = offs["b1"], offs["b2"], offs["b3"]

    def kernel(x_ref, p_ref, o_ref):
        xb = x_ref[...]                                   # (ID, tile_b), batch in lanes
        # Sublane-aligned, static slices straight off the resident param ref.
        w1t = p_ref[o_w1:o_w1 + H, :ID]                   # (H, ID)
        w2t = p_ref[o_w2:o_w2 + H, :H]                    # (H, H)
        w3t = p_ref[o_w3:o_w3 + OD, :H]                   # (OD, H)
        b1 = p_ref[o_b1:o_b1 + H, 0:1]                    # (H, 1)
        b2 = p_ref[o_b2:o_b2 + H, 0:1]                    # (H, 1)
        b3 = p_ref[o_b3:o_b3 + OD, 0:1]                   # (OD, 1)

        h1 = jnp.maximum(
            jnp.dot(w1t, xb, preferred_element_type=jnp.float32) + b1, 0.0)   # (H, tile_b)
        h2 = jnp.maximum(
            jnp.dot(w2t, h1, preferred_element_type=jnp.float32) + b2, 0.0)   # (H, tile_b)
        z = jnp.dot(w3t, h2, preferred_element_type=jnp.float32) + b3          # (OD, tile_b)
        o_ref[...] = jax.nn.sigmoid(z)                    # lane-dense store

    cost = pl.CostEstimate(
        flops=2 * B_pad * (ID * H + H * H + H * OD),
        transcendentals=B_pad * OD,
        bytes_accessed=4 * (B_pad * ID + B_pad * OD + int(packed.size)),
    )

    out_t = pl.pallas_call(
        kernel,
        out_shape=jax.ShapeDtypeStruct((OD, B_pad), jnp.float32),
        grid=(num_tiles,),
        in_specs=[
            pl.BlockSpec((ID, tile_b), lambda i: (0, i)),      # lane-dense activations
            pl.BlockSpec(packed.shape, lambda i: (0, 0)),      # params stay resident
        ],
        out_specs=pl.BlockSpec((OD, tile_b), lambda i: (0, i)),
        compiler_params=pltpu.CompilerParams(
            dimension_semantics=("parallel",),
            vmem_limit_bytes=32 * 1024 * 1024,
        ),
        cost_estimate=cost,
    )(xt, packed)

    if return_transposed:
        return out_t[:, :B]          # (OD, B): skips the epilogue transpose copy
    return out_t.T[:B]               # (B, OD): PyTorch-module layout


def init_params(key, input_dim=3, hidden_dim=10, output_dim=1):
    """Deterministic init mimicking torch nn.Linear (uniform +/- 1/sqrt(fan_in))."""
    ks = jax.random.split(key, 6)

    def lin(kw, kb, fan_in, fan_out):
        bound = 1.0 / jnp.sqrt(jnp.float32(fan_in))
        w = jax.random.uniform(kw, (fan_in, fan_out), jnp.float32, -bound, bound)
        b = jax.random.uniform(kb, (1, fan_out), jnp.float32, -bound, bound)
        return w, b

    w1, b1 = lin(ks[0], ks[1], input_dim, hidden_dim)
    w2, b2 = lin(ks[2], ks[3], hidden_dim, hidden_dim)
    w3, b3 = lin(ks[4], ks[5], hidden_dim, output_dim)
    return {"w1": w1, "b1": b1, "w2": w2, "b2": b2, "w3": w3, "b3": b3}


def reference_forward(x, p):
    h1 = jnp.maximum(x @ p["w1"] + p["b1"], 0.0)
    h2 = jnp.maximum(h1 @ p["w2"] + p["b2"], 0.0)
    return jax.nn.sigmoid(h2 @ p["w3"] + p["b3"])


if __name__ == "__main__":
    key = jax.random.PRNGKey(0)
    k_x, k_p = jax.random.split(key)

    B, input_dim, hidden_dim, output_dim = 8, 3, 10, 1
    x = jax.random.normal(k_x, (B, input_dim), jnp.float32)
    params = init_params(k_p, input_dim, hidden_dim, output_dim)

    out = risk_score_forward(x, params)
    out = jax.block_until_ready(out)
    ref = reference_forward(x, params)
    assert out.shape == (B, output_dim), out.shape
    assert jnp.allclose(out, ref, atol=2e-5, rtol=2e-5), (out, ref)

    # Small second check that exercises batch padding + a multi-step grid.
    B2 = 300
    x2 = jax.random.normal(jax.random.PRNGKey(1), (B2, input_dim), jnp.float32)
    out2 = jax.block_until_ready(risk_score_forward(x2, params, tile_b=128))
    ref2 = reference_forward(x2, params)
    assert out2.shape == (B2, output_dim), out2.shape
    assert jnp.allclose(out2, ref2, atol=2e-5, rtol=2e-5)

    print("KERNEL_OK")
</pallas_src>

<mosaic_0001>
module attributes {stable_mosaic.version = 11 : i64} {
  func.func @kernel(%arg0: i32, %arg1: memref<3x128xf32, #tpu.memory_space<vmem>>, %arg2: memref<80x10xf32, #tpu.memory_space<vmem>>, %arg3: memref<1x128xf32, #tpu.memory_space<vmem>>) attributes {dimension_semantics = [#tpu.dimension_semantics<parallel>], iteration_bounds = array<i64: 1>, scalar_prefetch = 0 : i64, scratch_operands = 0 : i64, tpu.core_type = #tpu.core_type<tc>, window_params = [{transform_indices = @transform_0, window_bounds = array<i64: 3, 128>}, {pipeline_mode = #tpu.pipeline_mode<synchronous>, transform_indices = @transform_1, window_bounds = array<i64: 80, 10>}, {transform_indices = @transform_2, window_bounds = array<i64: 1, 128>}]} {
    %c0 = arith.constant 0 : index
    %c0_0 = arith.constant 0 : index
    %0 = vector.load %arg1[%c0, %c0_0] : memref<3x128xf32, #tpu.memory_space<vmem>>, vector<3x128xf32>
    %c0_1 = arith.constant 0 : index
    %c0_2 = arith.constant 0 : index
    %1 = vector.load %arg2[%c0_1, %c0_2] : memref<80x10xf32, #tpu.memory_space<vmem>>, vector<10x3xf32>
    %c16 = arith.constant 16 : index
    %c0_3 = arith.constant 0 : index
    %2 = vector.load %arg2[%c16, %c0_3] : memref<80x10xf32, #tpu.memory_space<vmem>>, vector<10x10xf32>
    %c32 = arith.constant 32 : index
    %c0_4 = arith.constant 0 : index
    %3 = vector.load %arg2[%c32, %c0_4] : memref<80x10xf32, #tpu.memory_space<vmem>>, vector<1x10xf32>
    %c40 = arith.constant 40 : index
    %c0_5 = arith.constant 0 : index
    %4 = vector.load %arg2[%c40, %c0_5] : memref<80x10xf32, #tpu.memory_space<vmem>>, vector<10x1xf32>
    %c56 = arith.constant 56 : index
    %c0_6 = arith.constant 0 : index
    %5 = vector.load %arg2[%c56, %c0_6] : memref<80x10xf32, #tpu.memory_space<vmem>>, vector<10x1xf32>
    %c72 = arith.constant 72 : index
    %c0_7 = arith.constant 0 : index
    %6 = vector.load %arg2[%c72, %c0_7] : memref<80x10xf32, #tpu.memory_space<vmem>>, vector<1x1xf32>
    %cst = arith.constant dense<0.000000e+00> : vector<10x128xf32>
    %7 = tpu.matmul %1, %0, %cst {dimension_numbers = #tpu.dot_dimension_numbers<[1], [0], [0], [1], [0, 0, 1, 1], [], []>} : vector<10x3xf32>, vector<3x128xf32>, vector<10x128xf32> -> vector<10x128xf32>
    %8 = vector.broadcast %4 : vector<10x1xf32> to vector<10x128xf32>
    %9 = arith.addf %7, %8 : vector<10x128xf32>
    %cst_8 = arith.constant 0.000000e+00 : f32
    %10 = vector.broadcast %cst_8 : f32 to vector<10x128xf32>
    %11 = arith.maximumf %9, %10 : vector<10x128xf32>
    %cst_9 = arith.constant dense<0.000000e+00> : vector<10x128xf32>
    %12 = tpu.matmul %2, %11, %cst_9 {dimension_numbers = #tpu.dot_dimension_numbers<[1], [0], [0], [1], [0, 0, 1, 1], [], []>} : vector<10x10xf32>, vector<10x128xf32>, vector<10x128xf32> -> vector<10x128xf32>
    %13 = vector.broadcast %5 : vector<10x1xf32> to vector<10x128xf32>
    %14 = arith.addf %12, %13 : vector<10x128xf32>
    %cst_10 = arith.constant 0.000000e+00 : f32
    %15 = vector.broadcast %cst_10 : f32 to vector<10x128xf32>
    %16 = arith.maximumf %14, %15 : vector<10x128xf32>
    %cst_11 = arith.constant dense<0.000000e+00> : vector<1x128xf32>
    %17 = tpu.matmul %3, %16, %cst_11 {dimension_numbers = #tpu.dot_dimension_numbers<[1], [0], [0], [1], [0, 0, 1, 1], [], []>} : vector<1x10xf32>, vector<10x128xf32>, vector<1x128xf32> -> vector<1x128xf32>
    %18 = vector.broadcast %6 : vector<1x1xf32> to vector<1x128xf32>
    %19 = arith.addf %17, %18 : vector<1x128xf32>
    %20 = arith.negf %19 : vector<1x128xf32>
    %21 = math.exp %20 : vector<1x128xf32>
    %cst_12 = arith.constant 1.000000e+00 : f32
    %22 = vector.broadcast %cst_12 : f32 to vector<1x128xf32>
    %23 = arith.addf %22, %21 : vector<1x128xf32>
    %24 = arith.divf %22, %23 : vector<1x128xf32>
    %c0_13 = arith.constant 0 : index
    %c0_14 = arith.constant 0 : index
    %25 = vector.load %arg3[%c0_13, %c0_14] : memref<1x128xf32, #tpu.memory_space<vmem>>, vector<1x128xf32>
    tpu.vector_store %arg3[%c0_13, %c0_14], %24 {strides = array<i32>} : memref<1x128xf32, #tpu.memory_space<vmem>>, vector<1x128xf32>,
    return
  }
  func.func @transform_0(%arg0: i32) -> (i32, i32) {
    %c0_i32 = arith.constant 0 : i32
    %c0_i32_0 = arith.constant 0 : i32
    return %c0_i32, %arg0 : i32, i32
  }
  func.func @transform_1(%arg0: i32) -> (i32, i32) {
    %c0_i32 = arith.constant 0 : i32
    %c0_i32_0 = arith.constant 0 : i32
    %c0_i32_1 = arith.constant 0 : i32
    return %c0_i32, %c0_i32_0 : i32, i32
  }
  func.func @transform_2(%arg0: i32) -> (i32, i32) {
    %c0_i32 = arith.constant 0 : i32
    %c0_i32_0 = arith.constant 0 : i32
    return %c0_i32, %arg0 : i32, i32
  }
}

</mosaic_0001>

<llo_original>
// kernel: tpu_custom_call.1
$region0: #{tpu_custom_call.1}
  #allocation0 [shape = 'u32[]', space=smem, size = 0x4, offset = 0x4, fixed_abs, tag = 'smem constant byte address 0x4 - core index']
  #allocation1 [shape = 'u32[144,128]{1,0:T(1,128)}', space=vmem, size = 0x12000, scoped, tag = 'internal scratch']
  %s0 = inlined_call_operand.vmem [shape: f32[3,128], index: 0, kind: input, shape index: {}]
  %s1 = inlined_call_operand.vmem [shape: f32[80,10], index: 1, kind: input, shape index: {}]
  %s2 = inlined_call_operand.hbm [shape: f32[1,128], index: 2, kind: output, shape index: {}]
  %s3 = sld [smem:[#allocation0]]
  $region18: #{tpu_custom_call.1} parent=0
    _
  %s5 = ssub.s32 1, %s3
  %s6 = scalar_select 0, %s5, %s3
  $region1: #{tpu_custom_call.1} parent=0
    #allocation2 [shape = 'u8[512]{0}', space=vmem, size = 0x400, scoped, tag = 'output window, operand 0, single buffered']
    #allocation3 [shape = 's32[1]{0}', space=sflag, size = 0x4, scoped, tag = 'scoped memory for tpu_custom_call.1']
    %7 = vsyncpa [#allocation3], 0
    // Predicated region
    $region2: #{tpu_custom_call.1} parent=1 // pred_check
      _
    $region3: #{tpu_custom_call.1} parent=1 // pred_check_branch
      %9 = sbr.rel (0) target = $region5
    $region4: #{tpu_custom_call.1} parent=1 // pred_region
      _
    $region5: #{tpu_custom_call.1} parent=1 // pred_fallthru
      _
    // Predicated region
    $region6: #{tpu_custom_call.1} parent=1 // pred_check
      _
    $region7: #{tpu_custom_call.1} parent=1 // pred_check_branch
      %11 = sbr.rel (0) target = $region9
    $region8: #{tpu_custom_call.1} parent=1 // pred_region
      _
    $region9: #{tpu_custom_call.1} parent=1 // pred_fallthru
      _
    %v12 = vld [vmem:[%s0] sm:$0x7]
    %v13 = vld [vmem:[%s1] sm:$0xff]
    %v14 = vld [vmem:[%s1 + $0x8] sm:$0x3]
    %v15 = vld [vmem:[%s1 + $0x10] sm:$0xff]
    %v16 = vld [vmem:[%s1 + $0x18] sm:$0x3]
    %v17 = vld [vmem:[%s1 + $0x20] sm:$0x1]
    %v18 = vld [vmem:[%s1 + $0x28] sm:$0xff]
    %v19 = vld [vmem:[%s1 + $0x30] sm:$0x3]
    %v20 = vld [vmem:[%s1 + $0x38] sm:$0xff]
    %v21 = vld [vmem:[%s1 + $0x40] sm:$0x3]
    %v22 = vld [vmem:[%s1 + $0x48] sm:$0x1]
    %24 = vset.pattern.permute.xlu0 0
    %25 = vperm.xlu0 %24, %v18
    %v26 = vpop.permute.xlu0 %25
    %29 = vset.pattern.permute.xlu0 0
    %30 = vperm.xlu0 %29, %v19
    %v31 = vpop.permute.xlu0 %30
    %vm33 = vcmask 23552
    %v35 = vsel %vm33, %v13, 0
    %v38 = vsel %vm33, %v14, 0
    %vm40 = vcmask 1042432
    %v42 = vsel %vm40, %v12, 0
    %44 = vmatprep.subr.mxu0 0.0
    %45 = vmatpush1.msra.mxu0 %v42
    %46 = vmatprep.subr.mxu0 0.0
    %47 = vmatpush1.msra.mxu0 0.0
    %48 = vmatprep.subr.mxu0 0.0
    %49 = vmatpush1.msra.mxu0 0.0
    %50 = vmatprep.subr.mxu0 0.0
    %51 = vmatpush1.msra.mxu0 0.0
    %52 = vmatprep.subr.mxu0 0.0
    %53 = vmatpush1.msra.mxu0 0.0
    %54 = vmatprep.subr.mxu0 0.0
    %55 = vmatpush1.msra.mxu0 0.0
    %56 = vmatprep.subr.mxu0 0.0
    %57 = vmatpush1.msra.mxu0 0.0
    %58 = vmatprep.subr.mxu0 0.0
    %59 = vmatpush1.msra.mxu0 0.0
    %60 = vmatprep.subr.mxu0 0.0
    %61 = vmatpush1.msra.mxu0 0.0
    %62 = vmatprep.subr.mxu0 0.0
    %63 = vmatpush1.msra.mxu0 0.0
    %64 = vmatprep.subr.mxu0 0.0
    %65 = vmatpush1.msra.mxu0 0.0
    %66 = vmatprep.subr.mxu0 0.0
    %67 = vmatpush1.msra.mxu0 0.0
    %68 = vmatprep.subr.mxu0 0.0
    %69 = vmatpush1.msra.mxu0 0.0
    %70 = vmatprep.subr.mxu0 0.0
    %71 = vmatpush1.msra.mxu0 0.0
    %72 = vmatprep.subr.mxu0 0.0
    %73 = vmatpush1.msra.mxu0 0.0
    %74 = vmatprep.subr.mxu0 0.0
    %75 = vmatpush1.msra.mxu0 0.0
    %76 = vmatprep.subr.mxu0 0.0
    %77 = vmatpush1.msra.mxu0 0.0
    %78 = vmatprep.subr.mxu0 0.0
    %79 = vmatpush1.msra.mxu0 0.0
    %80 = vmatprep.subr.mxu0 0.0
    %81 = vmatpush1.msra.mxu0 0.0
    %82 = vmatprep.subr.mxu0 0.0
    %83 = vmatpush1.msra.mxu0 0.0
    %84 = vmatprep.subr.mxu0 0.0
    %85 = vmatpush1.msra.mxu0 0.0
    %86 = vmatprep.subr.mxu0 0.0
    %87 = vmatpush1.msra.mxu0 0.0
    %88 = vmatprep.subr.mxu0 0.0
    %89 = vmatpush1.msra.mxu0 0.0
    %90 = vmatprep.subr.mxu0 0.0
    %91 = vmatpush1.msra.mxu0 0.0
    %92 = vmatprep.subr.mxu0 0.0
    %93 = vmatpush1.msra.mxu0 0.0
    %94 = vmatprep.subr.mxu0 0.0
    %95 = vmatpush1.msra.mxu0 0.0
    %96 = vmatprep.subr.mxu0 0.0
    %97 = vmatpush1.msra.mxu0 0.0
    %98 = vmatprep.subr.mxu0 0.0
    %99 = vmatpush1.msra.mxu0 0.0
    %100 = vmatprep.subr.mxu0 0.0
    %101 = vmatpush1.msra.mxu0 0.0
    %102 = vmatprep.subr.mxu0 0.0
    %103 = vmatpush1.msra.mxu0 0.0
    %104 = vmatprep.subr.mxu0 0.0
    %105 = vmatpush1.msra.mxu0 0.0
    %106 = vmatprep.subr.mxu0 0.0
    %107 = vmatpush1.msra.mxu0 0.0
    %108 = vmatprep.mubr.f32.mxu0 0.0
    %109 = vmatmul.mubr.f32.gmra.mrb[0].mxu0 %v35
    %v110 = vpop.f32.mrb[0].mxu0
    %v111 = vadd.f32 %v26, %v110
    %v112 = vpop.f32.mrb[0].mxu0
    %113 = vmatprep.mubr.f32.mxu0 0.0
    %114 = vmatmul.mubr.f32.gmra.mrb[0].mxu0 %v38
    %v115 = vpop.f32.mrb[0].mxu0
    %v116 = vadd.f32 %v31, %v115
    %v117 = vpop.f32.mrb[0].mxu0
    %118 = vdwg.mxu0
    %v119 = vmax.f32 %v111, 0.0
    %v120 = vmax.f32 %v116, 0.0
    %122 = vset.pattern.permute.xlu0 0
    %123 = vperm.xlu0 %122, %v20
    %v124 = vpop.permute.xlu0 %123
    %127 = vset.pattern.permute.xlu0 0
    %128 = vperm.xlu0 %127, %v21
    %v129 = vpop.permute.xlu0 %128
    %vm131 = vcmask 80896
    %v133 = vsel %vm131, %v15, 0
    %v136 = vsel %vm131, %v16, 0
    %vm138 = vcmask 1041408
    %v140 = vsel %vm138, %v120, 0
    %142 = vmatprep.subr.mxu0 0.0
    %143 = vmatpush1.msra.mxu0 %v119
    %144 = vmatprep.subr.mxu0 0.0
    %145 = vmatpush1.msra.mxu0 %v140
    %146 = vmatprep.subr.mxu0 0.0
    %147 = vmatpush1.msra.mxu0 0.0
    %148 = vmatprep.subr.mxu0 0.0
    %149 = vmatpush1.msra.mxu0 0.0
    %150 = vmatprep.subr.mxu0 0.0
    %151 = vmatpush1.msra.mxu0 0.0
    %152 = vmatprep.subr.mxu0 0.0
    %153 = vmatpush1.msra.mxu0 0.0
    %154 = vmatprep.subr.mxu0 0.0
    %155 = vmatpush1.msra.mxu0 0.0
    %156 = vmatprep.subr.mxu0 0.0
    %157 = vmatpush1.msra.mxu0 0.0
    %158 = vmatprep.subr.mxu0 0.0
    %159 = vmatpush1.msra.mxu0 0.0
    %160 = vmatprep.subr.mxu0 0.0
    %161 = vmatpush1.msra.mxu0 0.0
    %162 = vmatprep.subr.mxu0 0.0
    %163 = vmatpush1.msra.mxu0 0.0
    %164 = vmatprep.subr.mxu0 0.0
    %165 = vmatpush1.msra.mxu0 0.0
    %166 = vmatprep.subr.mxu0 0.0
    %167 = vmatpush1.msra.mxu0 0.0
    %168 = vmatprep.subr.mxu0 0.0
    %169 = vmatpush1.msra.mxu0 0.0
    %170 = vmatprep.subr.mxu0 0.0
    %171 = vmatpush1.msra.mxu0 0.0
    %172 = vmatprep.subr.mxu0 0.0
    %173 = vmatpush1.msra.mxu0 0.0
    %174 = vmatprep.subr.mxu0 0.0
    %175 = vmatpush1.msra.mxu0 0.0
    %176 = vmatprep.subr.mxu0 0.0
    %177 = vmatpush1.msra.mxu0 0.0
    %178 = vmatprep.subr.mxu0 0.0
    %179 = vmatpush1.msra.mxu0 0.0
    %180 = vmatprep.subr.mxu0 0.0
    %181 = vmatpush1.msra.mxu0 0.0
    %182 = vmatprep.subr.mxu0 0.0
    %183 = vmatpush1.msra.mxu0 0.0
    %184 = vmatprep.subr.mxu0 0.0
    %185 = vmatpush1.msra.mxu0 0.0
    %186 = vmatprep.subr.mxu0 0.0
    %187 = vmatpush1.msra.mxu0 0.0
    %188 = vmatprep.subr.mxu0 0.0
    %189 = vmatpush1.msra.mxu0 0.0
    %190 = vmatprep.subr.mxu0 0.0
    %191 = vmatpush1.msra.mxu0 0.0
    %192 = vmatprep.subr.mxu0 0.0
    %193 = vmatpush1.msra.mxu0 0.0
    %194 = vmatprep.subr.mxu0 0.0
    %195 = vmatpush1.msra.mxu0 0.0
    %196 = vmatprep.subr.mxu0 0.0
    %197 = vmatpush1.msra.mxu0 0.0
    %198 = vmatprep.subr.mxu0 0.0
    %199 = vmatpush1.msra.mxu0 0.0
    %200 = vmatprep.subr.mxu0 0.0
    %201 = vmatpush1.msra.mxu0 0.0
    %202 = vmatprep.subr.mxu0 0.0
    %203 = vmatpush1.msra.mxu0 0.0
    %204 = vmatprep.subr.mxu0 0.0
    %205 = vmatpush1.msra.mxu0 0.0
    %206 = vmatprep.mubr.f32.mxu0 0.0
    %207 = vmatmul.mubr.f32.gmra.mrb[0].mxu0 %v133
    %v208 = vpop.f32.mrb[0].mxu0
    %v209 = vadd.f32 %v124, %v208
    %v210 = vpop.f32.mrb[0].mxu0
    %211 = vmatprep.mubr.f32.mxu0 0.0
    %212 = vmatmul.mubr.f32.gmra.mrb[0].mxu0 %v136
    %v213 = vpop.f32.mrb[0].mxu0
    %v214 = vadd.f32 %v129, %v213
    %v215 = vpop.f32.mrb[0].mxu0
    %216 = vdwg.mxu0
    %v217 = vmax.f32 %v209, 0.0
    %v218 = vmax.f32 %v214, 0.0
    %220 = vset.pattern.permute.xlu0 0
    %221 = vperm.xlu0 %220, %v22
    %v222 = vpop.permute.xlu0 %221
    %v225 = vsel %vm131, %v17, 0
    %v228 = vsel %vm138, %v218, 0
    %230 = vmatprep.subr.mxu0 0.0
    %231 = vmatpush1.msra.mxu0 %v217
    %232 = vmatprep.subr.mxu0 0.0
    %233 = vmatpush1.msra.mxu0 %v228
    %234 = vmatprep.subr.mxu0 0.0
    %235 = vmatpush1.msra.mxu0 0.0
    %236 = vmatprep.subr.mxu0 0.0
    %237 = vmatpush1.msra.mxu0 0.0
    %238 = vmatprep.subr.mxu0 0.0
    %239 = vmatpush1.msra.mxu0 0.0
    %240 = vmatprep.subr.mxu0 0.0
    %241 = vmatpush1.msra.mxu0 0.0
    %242 = vmatprep.subr.mxu0 0.0
    %243 = vmatpush1.msra.mxu0 0.0
    %244 = vmatprep.subr.mxu0 0.0
    %245 = vmatpush1.msra.mxu0 0.0
    %246 = vmatprep.subr.mxu0 0.0
    %247 = vmatpush1.msra.mxu0 0.0
    %248 = vmatprep.subr.mxu0 0.0
    %249 = vmatpush1.msra.mxu0 0.0
    %250 = vmatprep.subr.mxu0 0.0
    %251 = vmatpush1.msra.mxu0 0.0
    %252 = vmatprep.subr.mxu0 0.0
    %253 = vmatpush1.msra.mxu0 0.0
    %254 = vmatprep.subr.mxu0 0.0
    %255 = vmatpush1.msra.mxu0 0.0
    %256 = vmatprep.subr.mxu0 0.0
    %257 = vmatpush1.msra.mxu0 0.0
    %258 = vmatprep.subr.mxu0 0.0
    %259 = vmatpush1.msra.mxu0 0.0
    %260 = vmatprep.subr.mxu0 0.0
    %261 = vmatpush1.msra.mxu0 0.0
    %262 = vmatprep.subr.mxu0 0.0
    %263 = vmatpush1.msra.mxu0 0.0
    %264 = vmatprep.subr.mxu0 0.0
    %265 = vmatpush1.msra.mxu0 0.0
    %266 = vmatprep.subr.mxu0 0.0
    %267 = vmatpush1.msra.mxu0 0.0
    %268 = vmatprep.subr.mxu0 0.0
    %269 = vmatpush1.msra.mxu0 0.0
    %270 = vmatprep.subr.mxu0 0.0
    %271 = vmatpush1.msra.mxu0 0.0
    %272 = vmatprep.subr.mxu0 0.0
    %273 = vmatpush1.msra.mxu0 0.0
    %274 = vmatprep.subr.mxu0 0.0
    %275 = vmatpush1.msra.mxu0 0.0
    %276 = vmatprep.subr.mxu0 0.0
    %277 = vmatpush1.msra.mxu0 0.0
    %278 = vmatprep.subr.mxu0 0.0
    %279 = vmatpush1.msra.mxu0 0.0
    %280 = vmatprep.subr.mxu0 0.0
    %281 = vmatpush1.msra.mxu0 0.0
    %282 = vmatprep.subr.mxu0 0.0
    %283 = vmatpush1.msra.mxu0 0.0
    %284 = vmatprep.subr.mxu0 0.0
    %285 = vmatpush1.msra.mxu0 0.0
    %286 = vmatprep.subr.mxu0 0.0
    %287 = vmatpush1.msra.mxu0 0.0
    %288 = vmatprep.subr.mxu0 0.0
    %289 = vmatpush1.msra.mxu0 0.0
    %290 = vmatprep.subr.mxu0 0.0
    %291 = vmatpush1.msra.mxu0 0.0
    %292 = vmatprep.subr.mxu0 0.0
    %293 = vmatpush1.msra.mxu0 0.0
    %294 = vmatprep.mubr.f32.mxu0 0.0
    %295 = vmatmul.mubr.f32.gmra.mrb[0].mxu0 %v225
    %v296 = vpop.f32.mrb[0].mxu0
    %v297 = vadd.f32 %v222, %v296
    %v298 = vpop.f32.mrb[0].mxu0
    %299 = vdwg.mxu0
    %v300 = vxor.u32 %v297, 2147483648
    %v301 = vmul.f32 %v300, 1.442695
    %v302 = vpow.pop %v301
    %v303 = vadd.f32 %v302, 1.0
    %v304 = vrcp.pop %v303
    %v305 = vmul.f32 1.0, %v304
    %306 = vst [vmem:[#allocation2] sm:$0x1] %v305
    // Predicated region
    $region10: #{tpu_custom_call.1} parent=1 // pred_check
      _
    $region11: #{tpu_custom_call.1} parent=1 // pred_check_branch
      %308 = sbr.rel (0) target = $region13
    $region12: #{tpu_custom_call.1} parent=1 // pred_region
      %s310 = ssub.s32 16, 16
      %311 = vsyncadd [#allocation3], %s310
      %s313 = sshll.u32 [#allocation2], 4
      %s314 = int_to_ptr.vmem [resolvable:$true] %s313
      %316 = dma.vmem_to_hbm [thread:$0]  %s314, 16, %s2, [#allocation3]
    $region13: #{tpu_custom_call.1} parent=1 // pred_fallthru
      _
    // Predicated region
    $region14: #{tpu_custom_call.1} parent=1 // pred_check
      _
    $region15: #{tpu_custom_call.1} parent=1 // pred_check_branch
      %318 = sbr.rel (0) target = $region17
    $region16: #{tpu_custom_call.1} parent=1 // pred_region
      %319 = dma.done [#allocation3], 16
    $region17: #{tpu_custom_call.1} parent=1 // pred_fallthru
      _
    %320 = vsyncpa [#allocation3], 1

</llo_original>
